<compile_context>
chip_gen: v6e
topology: v6e:2x2x1
jax: 0.10.0
libtpu: 0.0.40
codegen_flags: <defaults>
</compile_context>

<pallas_src>
import functools

import jax
import jax.numpy as jnp
from jax.experimental import pallas as pl
from jax.experimental.pallas import tpu as pltpu


def net_kernel(p_ref, wc_ref, gamma_ref, beta_ref, wlin_ref, blin_ref,
               out_ref, *, eps, wo):
    """Fused Conv2d -> BatchNorm2d(train) -> Linear, single pass.

    Layouts (rows = N*Ho is the lane axis of every large tensor):
      p_ref     (K, Wo*rows)   im2col patches, j-major along lanes
      wc_ref    (Co, K)        conv weight, LHS of the single MXU matmul
      gamma/beta (Co, 1)
      wlin_ref  (Lout, Wo)     SMEM scalars
      blin_ref  (Lout,)        SMEM scalars
      out_ref   (Lout, Co, rows)
    Conv bias is intentionally absent: it cancels under the BN mean subtraction.
    """
    Co, _K = wc_ref.shape
    Lout, _, rows = out_ref.shape
    inv_n = 1.0 / float(wo * rows)

    # ---- Conv2d: one lane-dense MXU matmul for all Wo output columns -------
    conv = jnp.dot(wc_ref[...], p_ref[...],
                   preferred_element_type=jnp.float32)        # (Co, Wo*rows)

    # ---- BatchNorm2d training-mode batch stats (biased var), one pass ------
    col_sum = jnp.sum(conv, axis=1, keepdims=True)            # (Co, 1)
    sq_sum = jnp.sum(conv * conv, axis=1, keepdims=True)      # (Co, 1)
    mean = col_sum * inv_n
    var = sq_sum * inv_n - mean * mean                        # E[x^2] - mean^2
    scale = jax.lax.rsqrt(var + eps) * gamma_ref[...]         # (Co, 1)
    base = beta_ref[...] - scale * mean                       # (Co, 1)

    # Static lane slices of the fused conv result (one per conv output column).
    slices = [conv[:, j * rows:(j + 1) * rows] for j in range(wo)]  # (Co, rows)

    # ---- Linear(Wo -> Lout) folded through BN -------------------------------
    # out_k = scale * S_k + base * W_k + blin[k],  S_k = sum_j wlin[k,j]*conv_j
    for k in range(Lout):
        s_k = slices[0] * wlin_ref[k, 0]
        wsum = wlin_ref[k, 0]
        for j in range(1, wo):
            s_k = s_k + slices[j] * wlin_ref[k, j]
            wsum = wsum + wlin_ref[k, j]
        out_ref[k] = scale * s_k + (base * wsum + blin_ref[k])


def build_patches(x, KH, KW):
    """im2col glue (plain JAX): (N,Ci,H,W) -> (Ci*KH*KW, Wo*N*Ho), j-major lanes."""
    N, C, H, W = x.shape
    Ho, Wo = H - KH + 1, W - KW + 1
    cols = [x[:, :, kh:kh + Ho, kw:kw + Wo]                   # (N,C,Ho,Wo)
            for kh in range(KH) for kw in range(KW)]
    p = jnp.stack(cols, axis=-1)                              # (N,C,Ho,Wo,KH*KW)
    p = jnp.transpose(p, (1, 4, 3, 0, 2))                     # (C,KH*KW,Wo,N,Ho)
    return p.reshape(C * KH * KW, Wo * N * Ho)


def mynetwork_forward(x, wconv, bconv, gamma, beta, wlin, blin, eps=1e-5):
    del bconv  # per-channel conv bias cancels exactly under BatchNorm's mean subtraction
    N, Cin, H, W = x.shape
    Cout, _, KH, KW = wconv.shape
    Ho, Wo = H - KH + 1, W - KW + 1
    Lout = wlin.shape[0]
    rows = N * Ho
    assert wlin.shape[1] == Wo, "Linear in_features must equal conv output width"

    patches = build_patches(x, KH, KW).astype(jnp.float32)        # (K, Wo*rows)
    wc = wconv.reshape(Cout, Cin * KH * KW).astype(jnp.float32)   # (Co, K)
    g = gamma.reshape(Cout, 1).astype(jnp.float32)
    b = beta.reshape(Cout, 1).astype(jnp.float32)

    # TODO(synk): at real sizes (rows >> 128) add a row-tiled grid over N*Ho
    # ("parallel" axis so v7x's 2 TCs both work, BN stats accumulated across an
    # "arbitrary" axis and finalized with pl.when), and cast matmul operands to
    # bf16; at this toy size a single full-extent invocation is correct and the
    # (8,128)/VMEM constraints make tiling counterproductive.
    out = pl.pallas_call(
        functools.partial(net_kernel, eps=eps, wo=Wo),
        out_shape=jax.ShapeDtypeStruct((Lout, Cout, rows), jnp.float32),
        in_specs=[
            pl.BlockSpec(memory_space=pltpu.MemorySpace.VMEM),  # patches
            pl.BlockSpec(memory_space=pltpu.MemorySpace.VMEM),  # conv weight
            pl.BlockSpec(memory_space=pltpu.MemorySpace.VMEM),  # bn gamma
            pl.BlockSpec(memory_space=pltpu.MemorySpace.VMEM),  # bn beta
            pl.BlockSpec(memory_space=pltpu.MemorySpace.SMEM),  # linear weight (scalars)
            pl.BlockSpec(memory_space=pltpu.MemorySpace.SMEM),  # linear bias (scalars)
        ],
        out_specs=pl.BlockSpec(memory_space=pltpu.MemorySpace.VMEM),
    )(patches, wc, g, b, wlin.astype(jnp.float32), blin.astype(jnp.float32))

    # (Lout, Co, N*Ho) -> (N, Co, Ho, Lout)  (matches PyTorch output layout)
    return jnp.transpose(out.reshape(Lout, Cout, N, Ho), (2, 1, 3, 0))


def reference(x, wconv, bconv, gamma, beta, wlin, blin, eps=1e-5):
    y = jax.lax.conv_general_dilated(
        x, wconv, (1, 1), "VALID",
        dimension_numbers=("NCHW", "OIHW", "NCHW")) + bconv[None, :, None, None]
    mean = y.mean(axis=(0, 2, 3), keepdims=True)
    var = ((y - mean) ** 2).mean(axis=(0, 2, 3), keepdims=True)
    ybn = (y - mean) / jnp.sqrt(var + eps) * gamma[None, :, None, None] \
        + beta[None, :, None, None]
    return jnp.einsum("nchw,kw->nchk", ybn, wlin) + blin


if __name__ == "__main__":
    N, Cin, H, W = 2, 5, 8, 7          # W=7 so conv output width = 5 = Linear in_features
    Cout, KH, KW = 5, 3, 3
    Lout = 2

    key = jax.random.PRNGKey(0)
    k1, k2, k3, k4, k5 = jax.random.split(key, 5)

    x = jax.random.normal(k1, (N, Cin, H, W), jnp.float32)

    fan_c = Cin * KH * KW
    bnd_c = 1.0 / (fan_c ** 0.5)
    wconv = jax.random.uniform(k2, (Cout, Cin, KH, KW), jnp.float32, -bnd_c, bnd_c)
    bconv = jax.random.uniform(k3, (Cout,), jnp.float32, -bnd_c, bnd_c)

    gamma = jnp.ones((Cout,), jnp.float32)   # BatchNorm2d default init
    beta = jnp.zeros((Cout,), jnp.float32)

    bnd_l = 1.0 / (5 ** 0.5)
    wlin = jax.random.uniform(k4, (Lout, 5), jnp.float32, -bnd_l, bnd_l)
    blin = jax.random.uniform(k5, (Lout,), jnp.float32, -bnd_l, bnd_l)

    y = mynetwork_forward(x, wconv, bconv, gamma, beta, wlin, blin)
    y = jax.block_until_ready(y)

    y_ref = reference(x, wconv, bconv, gamma, beta, wlin, blin)
    assert y.shape == (N, Cout, H - KH + 1, Lout), y.shape
    assert jnp.allclose(y, y_ref, atol=1e-4, rtol=1e-4), \
        float(jnp.max(jnp.abs(y - y_ref)))
    print("KERNEL_OK")
</pallas_src>

<mosaic_0001>
module attributes {stable_mosaic.version = 11 : i64} {
  func.func @net_kernel(%arg0: memref<45x60xf32, #tpu.memory_space<vmem>>, %arg1: memref<5x45xf32, #tpu.memory_space<vmem>>, %arg2: memref<5x1xf32, #tpu.memory_space<vmem>>, %arg3: memref<5x1xf32, #tpu.memory_space<vmem>>, %arg4: memref<2x5xf32, #tpu.memory_space<smem>>, %arg5: memref<2xf32, #tpu.memory_space<smem>>, %arg6: memref<2x5x12xf32, #tpu.memory_space<vmem>>) attributes {dimension_semantics = [], scalar_prefetch = 0 : i64, scratch_operands = 0 : i64, tpu.core_type = #tpu.core_type<tc>} {
    %c0 = arith.constant 0 : index
    %c0_0 = arith.constant 0 : index
    %0 = vector.load %arg1[%c0, %c0_0] : memref<5x45xf32, #tpu.memory_space<vmem>>, vector<5x45xf32>
    %c0_1 = arith.constant 0 : index
    %c0_2 = arith.constant 0 : index
    %1 = vector.load %arg0[%c0_1, %c0_2] : memref<45x60xf32, #tpu.memory_space<vmem>>, vector<45x60xf32>
    %cst = arith.constant dense<0.000000e+00> : vector<5x60xf32>
    %2 = tpu.matmul %0, %1, %cst {dimension_numbers = #tpu.dot_dimension_numbers<[1], [0], [0], [1], [0, 0, 1, 1], [], []>} : vector<5x45xf32>, vector<45x60xf32>, vector<5x60xf32> -> vector<5x60xf32>
    %cst_3 = arith.constant dense<0.000000e+00> : vector<5xf32>
    %3 = vector.multi_reduction <add>, %2, %cst_3 [1] : vector<5x60xf32> to vector<5xf32>
    %4 = vector.shape_cast %3 : vector<5xf32> to vector<5x1xf32>
    %5 = arith.mulf %2, %2 : vector<5x60xf32>
    %cst_4 = arith.constant dense<0.000000e+00> : vector<5xf32>
    %6 = vector.multi_reduction <add>, %5, %cst_4 [1] : vector<5x60xf32> to vector<5xf32>
    %7 = vector.shape_cast %6 : vector<5xf32> to vector<5x1xf32>
    %cst_5 = arith.constant 0.0166666675 : f32
    %8 = vector.broadcast %cst_5 : f32 to vector<5x1xf32>
    %9 = arith.mulf %4, %8 : vector<5x1xf32>
    %cst_6 = arith.constant 0.0166666675 : f32
    %10 = vector.broadcast %cst_6 : f32 to vector<5x1xf32>
    %11 = arith.mulf %7, %10 : vector<5x1xf32>
    %12 = arith.mulf %9, %9 : vector<5x1xf32>
    %13 = arith.subf %11, %12 : vector<5x1xf32>
    %cst_7 = arith.constant 9.99999974E-6 : f32
    %14 = vector.broadcast %cst_7 : f32 to vector<5x1xf32>
    %15 = arith.addf %13, %14 : vector<5x1xf32>
    %16 = math.rsqrt %15 : vector<5x1xf32>
    %c0_8 = arith.constant 0 : index
    %c0_9 = arith.constant 0 : index
    %17 = vector.load %arg2[%c0_8, %c0_9] : memref<5x1xf32, #tpu.memory_space<vmem>>, vector<5x1xf32>
    %18 = arith.mulf %16, %17 : vector<5x1xf32>
    %c0_10 = arith.constant 0 : index
    %c0_11 = arith.constant 0 : index
    %19 = vector.load %arg3[%c0_10, %c0_11] : memref<5x1xf32, #tpu.memory_space<vmem>>, vector<5x1xf32>
    %20 = arith.mulf %18, %9 : vector<5x1xf32>
    %21 = arith.subf %19, %20 : vector<5x1xf32>
    %22 = vector.extract_strided_slice %2 {offsets = [0, 0], sizes = [5, 12], strides = [1, 1]} : vector<5x60xf32> to vector<5x12xf32>
    %23 = vector.extract_strided_slice %2 {offsets = [0, 12], sizes = [5, 12], strides = [1, 1]} : vector<5x60xf32> to vector<5x12xf32>
    %24 = vector.extract_strided_slice %2 {offsets = [0, 24], sizes = [5, 12], strides = [1, 1]} : vector<5x60xf32> to vector<5x12xf32>
    %25 = vector.extract_strided_slice %2 {offsets = [0, 36], sizes = [5, 12], strides = [1, 1]} : vector<5x60xf32> to vector<5x12xf32>
    %26 = vector.extract_strided_slice %2 {offsets = [0, 48], sizes = [5, 12], strides = [1, 1]} : vector<5x60xf32> to vector<5x12xf32>
    %c0_12 = arith.constant 0 : index
    %c0_13 = arith.constant 0 : index
    %27 = memref.load %arg4[%c0_12, %c0_13] : memref<2x5xf32, #tpu.memory_space<smem>>
    %28 = vector.broadcast %27 : f32 to vector<5x12xf32>
    %29 = arith.mulf %22, %28 : vector<5x12xf32>
    %c0_14 = arith.constant 0 : index
    %c0_15 = arith.constant 0 : index
    %30 = memref.load %arg4[%c0_14, %c0_15] : memref<2x5xf32, #tpu.memory_space<smem>>
    %c0_16 = arith.constant 0 : index
    %c1 = arith.constant 1 : index
    %31 = memref.load %arg4[%c0_16, %c1] : memref<2x5xf32, #tpu.memory_space<smem>>
    %32 = vector.broadcast %31 : f32 to vector<5x12xf32>
    %33 = arith.mulf %23, %32 : vector<5x12xf32>
    %34 = arith.addf %29, %33 : vector<5x12xf32>
    %c0_17 = arith.constant 0 : index
    %c1_18 = arith.constant 1 : index
    %35 = memref.load %arg4[%c0_17, %c1_18] : memref<2x5xf32, #tpu.memory_space<smem>>
    %36 = arith.addf %30, %35 : f32
    %c0_19 = arith.constant 0 : index
    %c2 = arith.constant 2 : index
    %37 = memref.load %arg4[%c0_19, %c2] : memref<2x5xf32, #tpu.memory_space<smem>>
    %38 = vector.broadcast %37 : f32 to vector<5x12xf32>
    %39 = arith.mulf %24, %38 : vector<5x12xf32>
    %40 = arith.addf %34, %39 : vector<5x12xf32>
    %c0_20 = arith.constant 0 : index
    %c2_21 = arith.constant 2 : index
    %41 = memref.load %arg4[%c0_20, %c2_21] : memref<2x5xf32, #tpu.memory_space<smem>>
    %42 = arith.addf %36, %41 : f32
    %c0_22 = arith.constant 0 : index
    %c3 = arith.constant 3 : index
    %43 = memref.load %arg4[%c0_22, %c3] : memref<2x5xf32, #tpu.memory_space<smem>>
    %44 = vector.broadcast %43 : f32 to vector<5x12xf32>
    %45 = arith.mulf %25, %44 : vector<5x12xf32>
    %46 = arith.addf %40, %45 : vector<5x12xf32>
    %c0_23 = arith.constant 0 : index
    %c3_24 = arith.constant 3 : index
    %47 = memref.load %arg4[%c0_23, %c3_24] : memref<2x5xf32, #tpu.memory_space<smem>>
    %48 = arith.addf %42, %47 : f32
    %c0_25 = arith.constant 0 : index
    %c4 = arith.constant 4 : index
    %49 = memref.load %arg4[%c0_25, %c4] : memref<2x5xf32, #tpu.memory_space<smem>>
    %50 = vector.broadcast %49 : f32 to vector<5x12xf32>
    %51 = arith.mulf %26, %50 : vector<5x12xf32>
    %52 = arith.addf %46, %51 : vector<5x12xf32>
    %c0_26 = arith.constant 0 : index
    %c4_27 = arith.constant 4 : index
    %53 = memref.load %arg4[%c0_26, %c4_27] : memref<2x5xf32, #tpu.memory_space<smem>>
    %54 = arith.addf %48, %53 : f32
    %55 = vector.broadcast %18 : vector<5x1xf32> to vector<5x12xf32>
    %56 = arith.mulf %55, %52 : vector<5x12xf32>
    %57 = vector.broadcast %54 : f32 to vector<5x1xf32>
    %58 = arith.mulf %21, %57 : vector<5x1xf32>
    %c0_28 = arith.constant 0 : index
    %59 = memref.load %arg5[%c0_28] : memref<2xf32, #tpu.memory_space<smem>>
    %60 = vector.broadcast %59 : f32 to vector<5x1xf32>
    %61 = arith.addf %58, %60 : vector<5x1xf32>
    %62 = vector.broadcast %61 : vector<5x1xf32> to vector<5x12xf32>
    %63 = arith.addf %56, %62 : vector<5x12xf32>
    %c0_29 = arith.constant 0 : index
    %c0_30 = arith.constant 0 : index
    %c0_31 = arith.constant 0 : index
    %64 = vector.load %arg6[%c0_29, %c0_30, %c0_31] : memref<2x5x12xf32, #tpu.memory_space<vmem>>, vector<1x5x12xf32>
    %65 = vector.shape_cast %64 : vector<1x5x12xf32> to vector<5x12xf32>
    %66 = vector.shape_cast %63 : vector<5x12xf32> to vector<1x5x12xf32>
    tpu.vector_store %arg6[%c0_29, %c0_30, %c0_31], %66 {strides = array<i32>} : memref<2x5x12xf32, #tpu.memory_space<vmem>>, vector<1x5x12xf32>,
    %c1_32 = arith.constant 1 : index
    %c0_33 = arith.constant 0 : index
    %67 = memref.load %arg4[%c1_32, %c0_33] : memref<2x5xf32, #tpu.memory_space<smem>>
    %68 = vector.broadcast %67 : f32 to vector<5x12xf32>
    %69 = arith.mulf %22, %68 : vector<5x12xf32>
    %c1_34 = arith.constant 1 : index
    %c0_35 = arith.constant 0 : index
    %70 = memref.load %arg4[%c1_34, %c0_35] : memref<2x5xf32, #tpu.memory_space<smem>>
    %c1_36 = arith.constant 1 : index
    %c1_37 = arith.constant 1 : index
    %71 = memref.load %arg4[%c1_36, %c1_37] : memref<2x5xf32, #tpu.memory_space<smem>>
    %72 = vector.broadcast %71 : f32 to vector<5x12xf32>
    %73 = arith.mulf %23, %72 : vector<5x12xf32>
    %74 = arith.addf %69, %73 : vector<5x12xf32>
    %c1_38 = arith.constant 1 : index
    %c1_39 = arith.constant 1 : index
    %75 = memref.load %arg4[%c1_38, %c1_39] : memref<2x5xf32, #tpu.memory_space<smem>>
    %76 = arith.addf %70, %75 : f32
    %c1_40 = arith.constant 1 : index
    %c2_41 = arith.constant 2 : index
    %77 = memref.load %arg4[%c1_40, %c2_41] : memref<2x5xf32, #tpu.memory_space<smem>>
    %78 = vector.broadcast %77 : f32 to vector<5x12xf32>
    %79 = arith.mulf %24, %78 : vector<5x12xf32>
    %80 = arith.addf %74, %79 : vector<5x12xf32>
    %c1_42 = arith.constant 1 : index
    %c2_43 = arith.constant 2 : index
    %81 = memref.load %arg4[%c1_42, %c2_43] : memref<2x5xf32, #tpu.memory_space<smem>>
    %82 = arith.addf %76, %81 : f32
    %c1_44 = arith.constant 1 : index
    %c3_45 = arith.constant 3 : index
    %83 = memref.load %arg4[%c1_44, %c3_45] : memref<2x5xf32, #tpu.memory_space<smem>>
    %84 = vector.broadcast %83 : f32 to vector<5x12xf32>
    %85 = arith.mulf %25, %84 : vector<5x12xf32>
    %86 = arith.addf %80, %85 : vector<5x12xf32>
    %c1_46 = arith.constant 1 : index
    %c3_47 = arith.constant 3 : index
    %87 = memref.load %arg4[%c1_46, %c3_47] : memref<2x5xf32, #tpu.memory_space<smem>>
    %88 = arith.addf %82, %87 : f32
    %c1_48 = arith.constant 1 : index
    %c4_49 = arith.constant 4 : index
    %89 = memref.load %arg4[%c1_48, %c4_49] : memref<2x5xf32, #tpu.memory_space<smem>>
    %90 = vector.broadcast %89 : f32 to vector<5x12xf32>
    %91 = arith.mulf %26, %90 : vector<5x12xf32>
    %92 = arith.addf %86, %91 : vector<5x12xf32>
    %c1_50 = arith.constant 1 : index
    %c4_51 = arith.constant 4 : index
    %93 = memref.load %arg4[%c1_50, %c4_51] : memref<2x5xf32, #tpu.memory_space<smem>>
    %94 = arith.addf %88, %93 : f32
    %95 = vector.broadcast %18 : vector<5x1xf32> to vector<5x12xf32>
    %96 = arith.mulf %95, %92 : vector<5x12xf32>
    %97 = vector.broadcast %94 : f32 to vector<5x1xf32>
    %98 = arith.mulf %21, %97 : vector<5x1xf32>
    %c1_52 = arith.constant 1 : index
    %99 = memref.load %arg5[%c1_52] : memref<2xf32, #tpu.memory_space<smem>>
    %100 = vector.broadcast %99 : f32 to vector<5x1xf32>
    %101 = arith.addf %98, %100 : vector<5x1xf32>
    %102 = vector.broadcast %101 : vector<5x1xf32> to vector<5x12xf32>
    %103 = arith.addf %96, %102 : vector<5x12xf32>
    %c1_53 = arith.constant 1 : index
    %c0_54 = arith.constant 0 : index
    %c0_55 = arith.constant 0 : index
    %104 = vector.load %arg6[%c1_53, %c0_54, %c0_55] : memref<2x5x12xf32, #tpu.memory_space<vmem>>, vector<1x5x12xf32>
    %105 = vector.shape_cast %104 : vector<1x5x12xf32> to vector<5x12xf32>
    %106 = vector.shape_cast %103 : vector<5x12xf32> to vector<1x5x12xf32>
    tpu.vector_store %arg6[%c1_53, %c0_54, %c0_55], %106 {strides = array<i32>} : memref<2x5x12xf32, #tpu.memory_space<vmem>>, vector<1x5x12xf32>,
    return
  }
}

</mosaic_0001>

<llo_original>
// kernel: tpu_custom_call.1
$region0: #{tpu_custom_call.1}
  #allocation0 [shape = 'u32[]', space=smem, size = 0x4, offset = 0x4, fixed_abs, tag = 'smem constant byte address 0x4 - core index']
  #allocation1 [shape = 'u32[144,128]{1,0:T(1,128)}', space=vmem, size = 0x12000, scoped, tag = 'internal scratch']
  %s0 = inlined_call_operand.hbm [shape: f32[45,60], index: 0, kind: input, shape index: {}]
  %s1 = inlined_call_operand.vmem [shape: f32[5,45], index: 1, kind: input, shape index: {}]
  %s2 = inlined_call_operand.vmem [shape: f32[5,1], index: 2, kind: input, shape index: {}]
  %s3 = inlined_call_operand.vmem [shape: f32[5,1], index: 3, kind: input, shape index: {}]
  %s4 = inlined_call_operand.vmem [shape: f32[2,5], index: 4, kind: input, shape index: {}]
  %s5 = inlined_call_operand.vmem [shape: f32[2], index: 5, kind: input, shape index: {}]
  %s6 = inlined_call_operand.vmem [shape: f32[2,5,12], index: 6, kind: output, shape index: {}]
  %s7 = sld [smem:[#allocation0]]
  $region46: #{tpu_custom_call.1} parent=0
    _
  %s9 = ssub.s32 1, %s7
  %s10 = scalar_select 0, %s9, %s7
  $region1: #{tpu_custom_call.1} parent=0
    #allocation2 [shape = 'u8[24576]{0}', space=vmem, size = 0x6000, scoped, tag = 'input window, operand 0, single buffered']
    #allocation3 [shape = 's32[1]{0}', space=sflag, size = 0x4, scoped, tag = 'scoped memory for tpu_custom_call.1']
    #allocation4 [shape = 's32[1]{0}', space=sflag, size = 0x4, scoped, tag = 'scoped memory for tpu_custom_call.1']
    #allocation5 [shape = 'u8[1024]{0}', space=smem, size = 0x400, scoped, tag = 'input window, operand 4, single buffered']
    #allocation6 [shape = 'u8[512]{0}', space=smem, size = 0x200, scoped, tag = 'input window, operand 5, single buffered']
    #allocation7 [shape = 's32[1]{0}', space=sflag, size = 0x4, scoped, tag = 'scoped memory for tpu_custom_call.1']
    %11 = vsyncpa [#allocation3], 0
    %12 = vsyncpa [#allocation4], 0
    %13 = vsyncpa [#allocation7], 0
    // Predicated region
    $region2: #{tpu_custom_call.1} parent=1 // pred_check
      _
    $region3: #{tpu_custom_call.1} parent=1 // pred_check_branch
      %15 = sbr.rel (0) target = $region5
    $region4: #{tpu_custom_call.1} parent=1 // pred_region
      %s17 = ssub.s32 768, 768
      %18 = vsyncadd [#allocation3], %s17
      %s19 = sshll.u32 [#allocation2], 4
      %s20 = int_to_ptr.vmem [resolvable:$true] %s19
      %25 = dma.hbm_to_vmem [thread:$0]  %s0, 768, %s20, [#allocation3], 128, 128, 8
    $region5: #{tpu_custom_call.1} parent=1 // pred_fallthru
      _
    // Predicated region
    $region6: #{tpu_custom_call.1} parent=1 // pred_check
      _
    $region7: #{tpu_custom_call.1} parent=1 // pred_check_branch
      %27 = sbr.rel (0) target = $region9
    $region8: #{tpu_custom_call.1} parent=1 // pred_region
      _
    $region9: #{tpu_custom_call.1} parent=1 // pred_fallthru
      _
    // Predicated region
    $region10: #{tpu_custom_call.1} parent=1 // pred_check
      _
    $region11: #{tpu_custom_call.1} parent=1 // pred_check_branch
      %29 = sbr.rel (0) target = $region13
    $region12: #{tpu_custom_call.1} parent=1 // pred_region
      _
    $region13: #{tpu_custom_call.1} parent=1 // pred_fallthru
      _
    // Predicated region
    $region14: #{tpu_custom_call.1} parent=1 // pred_check
      _
    $region15: #{tpu_custom_call.1} parent=1 // pred_check_branch
      %31 = sbr.rel (0) target = $region17
    $region16: #{tpu_custom_call.1} parent=1 // pred_region
      _
    $region17: #{tpu_custom_call.1} parent=1 // pred_fallthru
      _
    // Predicated region
    $region18: #{tpu_custom_call.1} parent=1 // pred_check
      _
    $region19: #{tpu_custom_call.1} parent=1 // pred_check_branch
      %33 = sbr.rel (0) target = $region21
    $region20: #{tpu_custom_call.1} parent=1 // pred_region
      %s35 = ssub.s32 32, 32
      %36 = vsyncadd [#allocation4], %s35
      %s38 = sshll.u32 %s4, 4
      %s39 = int_to_ptr.vmem [resolvable:$true] %s38
      %41 = dma.vmem_to_smem %s39, 32, [#allocation5], [#allocation4]
    $region21: #{tpu_custom_call.1} parent=1 // pred_fallthru
      _
    // Predicated region
    $region22: #{tpu_custom_call.1} parent=1 // pred_check
      _
    $region23: #{tpu_custom_call.1} parent=1 // pred_check_branch
      %43 = sbr.rel (0) target = $region25
    $region24: #{tpu_custom_call.1} parent=1 // pred_region
      %s45 = ssub.s32 16, 16
      %46 = vsyncadd [#allocation7], %s45
      %s48 = sshll.u32 %s5, 4
      %s49 = int_to_ptr.vmem [resolvable:$true] %s48
      %51 = dma.vmem_to_smem %s49, 16, [#allocation6], [#allocation7]
    $region25: #{tpu_custom_call.1} parent=1 // pred_fallthru
      _
    // Predicated region
    $region26: #{tpu_custom_call.1} parent=1 // pred_check
      _
    $region27: #{tpu_custom_call.1} parent=1 // pred_check_branch
      %53 = sbr.rel (0) target = $region29
    $region28: #{tpu_custom_call.1} parent=1 // pred_region
      %54 = dma.done [#allocation3], 768
    $region29: #{tpu_custom_call.1} parent=1 // pred_fallthru
      _
    // Predicated region
    $region30: #{tpu_custom_call.1} parent=1 // pred_check
      _
    $region31: #{tpu_custom_call.1} parent=1 // pred_check_branch
      %56 = sbr.rel (0) target = $region33
    $region32: #{tpu_custom_call.1} parent=1 // pred_region
      %57 = dma.done [#allocation4], 32
    $region33: #{tpu_custom_call.1} parent=1 // pred_fallthru
      _
    // Predicated region
    $region34: #{tpu_custom_call.1} parent=1 // pred_check
      _
    $region35: #{tpu_custom_call.1} parent=1 // pred_check_branch
      %59 = sbr.rel (0) target = $region37
    $region36: #{tpu_custom_call.1} parent=1 // pred_region
      %60 = dma.done [#allocation7], 16
    $region37: #{tpu_custom_call.1} parent=1 // pred_fallthru
      _
    %61 = sfence
    %v62 = vld [vmem:[%s1] sm:$0x1f]
    %v63 = vld [vmem:[#allocation2] sm:$0xff]
    %v64 = vld [vmem:[#allocation2 + $0x8] sm:$0xff]
    %v65 = vld [vmem:[#allocation2 + $0x10] sm:$0xff]
    %v66 = vld [vmem:[#allocation2 + $0x18] sm:$0xff]
    %v67 = vld [vmem:[#allocation2 + $0x20] sm:$0xff]
    %v68 = vld [vmem:[#allocation2 + $0x28] sm:$0x1f]
    %vm69 = vcmask 367616
    %v71 = vsel %vm69, %v62, 0
    %vm73 = vcmask 1044480
    %v75 = vsel %vm73, %v68, 0
    %77 = vmatprep.subr.mxu0 0.0
    %78 = vmatpush1.msra.mxu0 0.0
    %79 = vmatprep.subr.mxu0 0.0
    %80 = vmatpush1.msra.mxu0 0.0
    %81 = vmatprep.subr.mxu0 0.0
    %82 = vmatpush1.msra.mxu0 0.0
    %83 = vmatprep.subr.mxu0 0.0
    %84 = vmatpush1.msra.mxu0 0.0
    %85 = vmatprep.subr.mxu0 0.0
    %86 = vmatpush1.msra.mxu0 0.0
    %87 = vmatprep.subr.mxu0 0.0
    %88 = vmatpush1.msra.mxu0 0.0
    %89 = vmatprep.subr.mxu0 0.0
    %90 = vmatpush1.msra.mxu0 0.0
    %91 = vmatprep.subr.mxu0 0.0
    %92 = vmatpush1.msra.mxu0 0.0
    %93 = vmatprep.subr.mxu0 0.0
    %94 = vmatpush1.msra.mxu0 0.0
    %95 = vmatprep.subr.mxu0 0.0
    %96 = vmatpush1.msra.mxu0 0.0
    %97 = vmatprep.subr.mxu0 0.0
    %98 = vmatpush1.msra.mxu0 %v75
    %99 = vmatprep.subr.mxu0 0.0
    %100 = vmatpush1.msra.mxu0 %v67
    %101 = vmatprep.subr.mxu0 0.0
    %102 = vmatpush1.msra.mxu0 %v66
    %103 = vmatprep.subr.mxu0 0.0
    %104 = vmatpush1.msra.mxu0 %v65
    %105 = vmatprep.subr.mxu0 0.0
    %106 = vmatpush1.msra.mxu0 %v64
    %107 = vmatprep.subr.mxu0 0.0
    %108 = vmatpush1.msra.mxu0 %v63
    %109 = vmatprep.subr.mxu0 0.0
    %110 = vmatpush2.msra.mxu0 0.0
    %111 = vmatprep.subr.mxu0 0.0
    %112 = vmatpush2.msra.mxu0 0.0
    %113 = vmatprep.subr.mxu0 0.0
    %114 = vmatpush2.msra.mxu0 0.0
    %115 = vmatprep.subr.mxu0 0.0
    %116 = vmatpush2.msra.mxu0 0.0
    %117 = vmatprep.subr.mxu0 0.0
    %118 = vmatpush2.msra.mxu0 0.0
    %119 = vmatprep.subr.mxu0 0.0
    %120 = vmatpush2.msra.mxu0 0.0
    %121 = vmatprep.subr.mxu0 0.0
    %122 = vmatpush2.msra.mxu0 0.0
    %123 = vmatprep.subr.mxu0 0.0
    %124 = vmatpush2.msra.mxu0 0.0
    %125 = vmatprep.subr.mxu0 0.0
    %126 = vmatpush2.msra.mxu0 0.0
    %127 = vmatprep.subr.mxu0 0.0
    %128 = vmatpush2.msra.mxu0 0.0
    %129 = vmatprep.subr.mxu0 0.0
    %130 = vmatpush2.msra.mxu0 0.0
    %131 = vmatprep.subr.mxu0 0.0
    %132 = vmatpush2.msra.mxu0 0.0
    %133 = vmatprep.subr.mxu0 0.0
    %134 = vmatpush2.msra.mxu0 0.0
    %135 = vmatprep.subr.mxu0 0.0
    %136 = vmatpush2.msra.mxu0 0.0
    %137 = vmatprep.subr.mxu0 0.0
    %138 = vmatpush2.msra.mxu0 0.0
    %139 = vmatprep.subr.mxu0 0.0
    %140 = vmatpush2.msra.mxu0 0.0
    %141 = vmatprep.mubr.f32.mxu0 0.0
    %142 = vmatmul.mubr.f32.gmra.mxu0 %v71
    %v143 = vpop.f32.mrf.mxu0
    %v144 = vadd.f32 0.0, %v143
    %v145 = vpop.f32.mrf.mxu0
    %146 = vdwg.mxu0
    %vm147 = vcmask 487424
    %v148 = vsel %vm147, %v144, 0.0
    %149 = vadd.xlane.f32.xlu0 %v148
    %v150 = vpop.xlane.xlu0 %149
    %v151 = vmul.f32 %v144, %v144
    %v152 = vsel %vm147, %v151, 0.0
    %153 = vadd.xlane.f32.xlu0 %v152
    %v154 = vpop.xlane.xlu0 %153
    %v155 = vmul.f32 %v150, 0.016666668
    %v156 = vmul.f32 %v154, 0.016666668
    %v157 = vmul.f32 %v155, %v155
    %v158 = vsub.f32 %v156, %v157
    %v159 = vadd.f32 %v158, 1e-05
    %v160 = vrsqrt.pop %v159
    %v161 = vld [vmem:[%s2] sm:$0x1f]
    %v162 = vmul.f32 %v160, %v161
    %v163 = vld [vmem:[%s3] sm:$0x1f]
    %v164 = vmul.f32 %v162, %v155
    %v165 = vsub.f32 %v163, %v164
    %s166 = sld [smem:[#allocation5]]
    %v167 = vstv %s166
    %v168 = vmul.f32 %v144, %v167
    %s169 = sld [smem:[#allocation5 + $0x1]]
    %v170 = vstv %s169
    %v171 = vmul.f32 %v144, %v170
    %173 = vrot.lane.b32.xlu0 %v171, 116
    %v174 = vpop.permute.xlu0 %173
    %v176 = vadd.f32 %v168, %v174
    %s177 = sadd.f32 %s166, %s169
    %s178 = sld [smem:[#allocation5 + $0x2]]
    %v179 = vstv %s178
    %v180 = vmul.f32 %v144, %v179
    %182 = vrot.lane.b32.xlu0 %v180, 104
    %v183 = vpop.permute.xlu0 %182
    %v185 = vadd.f32 %v176, %v183
    %s186 = sadd.f32 %s177, %s178
    %s187 = sld [smem:[#allocation5 + $0x3]]
    %v188 = vstv %s187
    %v189 = vmul.f32 %v144, %v188
    %191 = vrot.lane.b32.xlu0 %v189, 92
    %v192 = vpop.permute.xlu0 %191
    %v194 = vadd.f32 %v185, %v192
    %s195 = sadd.f32 %s186, %s187
    %s196 = sld [smem:[#allocation5 + $0x4]]
    %v197 = vstv %s196
    %v198 = vmul.f32 %v144, %v197
    %200 = vrot.lane.b32.xlu0 %v198, 80
    %v201 = vpop.permute.xlu0 %200
    %v203 = vadd.f32 %v194, %v201
    %s204 = sadd.f32 %s195, %s196
    %206 = vset.pattern.permute.xlu0 0
    %207 = vperm.xlu0 %206, %v162
    %v208 = vpop.permute.xlu0 %207
    %v210 = vmul.f32 %v208, %v203
    %v211 = vstv %s204
    %v212 = vmul.f32 %v165, %v211
    %s213 = sld [smem:[#allocation6]]
    %v214 = vstv %s213
    %v215 = vadd.f32 %v212, %v214
    %217 = vset.pattern.permute.xlu0 0
    %218 = vperm.xlu0 %217, %v215
    %v219 = vpop.permute.xlu0 %218
    %v221 = vadd.f32 %v210, %v219
    %vm222 = vcmask 94208
    %223 = vst.msk [vmem:[%s6] sm:$0x1f] %vm222, %v221
    %s224 = sld [smem:[#allocation5 + $0x80]]
    %v225 = vstv %s224
    %v226 = vmul.f32 %v144, %v225
    %s227 = sld [smem:[#allocation5 + $0x81]]
    %v228 = vstv %s227
    %v229 = vmul.f32 %v144, %v228
    %231 = vrot.lane.b32.xlu0 %v229, 116
    %v232 = vpop.permute.xlu0 %231
    %v234 = vadd.f32 %v226, %v232
    %s235 = sadd.f32 %s224, %s227
    %s236 = sld [smem:[#allocation5 + $0x82]]
    %v237 = vstv %s236
    %v238 = vmul.f32 %v144, %v237
    %240 = vrot.lane.b32.xlu0 %v238, 104
    %v241 = vpop.permute.xlu0 %240
    %v243 = vadd.f32 %v234, %v241
    %s244 = sadd.f32 %s235, %s236
    %s245 = sld [smem:[#allocation5 + $0x83]]
    %v246 = vstv %s245
    %v247 = vmul.f32 %v144, %v246
    %249 = vrot.lane.b32.xlu0 %v247, 92
    %v250 = vpop.permute.xlu0 %249
    %v252 = vadd.f32 %v243, %v250
    %s253 = sadd.f32 %s244, %s245
    %s254 = sld [smem:[#allocation5 + $0x84]]
    %v255 = vstv %s254
    %v256 = vmul.f32 %v144, %v255
    %258 = vrot.lane.b32.xlu0 %v256, 80
    %v259 = vpop.permute.xlu0 %258
    %v261 = vadd.f32 %v252, %v259
    %s262 = sadd.f32 %s253, %s254
    %v263 = vmul.f32 %v208, %v261
    %v264 = vstv %s262
    %v265 = vmul.f32 %v165, %v264
    %s266 = sld [smem:[#allocation6 + $0x1]]
    %v267 = vstv %s266
    %v268 = vadd.f32 %v265, %v267
    %270 = vset.pattern.permute.xlu0 0
    %271 = vperm.xlu0 %270, %v268
    %v272 = vpop.permute.xlu0 %271
    %v274 = vadd.f32 %v263, %v272
    %s275 = scalar_lea.vmem %s6, 8
    %276 = vst.msk [vmem:[%s275] sm:$0x1f] %vm222, %v274
    // Predicated region
    $region38: #{tpu_custom_call.1} parent=1 // pred_check
      _
    $region39: #{tpu_custom_call.1} parent=1 // pred_check_branch
      %278 = sbr.rel (0) target = $region41
    $region40: #{tpu_custom_call.1} parent=1 // pred_region
      _
    $region41: #{tpu_custom_call.1} parent=1 // pred_fallthru
      _
    // Predicated region
    $region42: #{tpu_custom_call.1} parent=1 // pred_check
      _
    $region43: #{tpu_custom_call.1} parent=1 // pred_check_branch
      %280 = sbr.rel (0) target = $region45
    $region44: #{tpu_custom_call.1} parent=1 // pred_region
      _
    $region45: #{tpu_custom_call.1} parent=1 // pred_fallthru
      _
    %281 = vsyncpa [#allocation3], 1
    %282 = vsyncpa [#allocation4], 1
    %283 = vsyncpa [#allocation7], 1

</llo_original>
